<compile_context>
chip_gen: v5e
topology: v5e:2x2
jax: 0.10.0
libtpu: 0.0.40
codegen_flags: <defaults>
</compile_context>

<pallas_src>
import jax
import jax.numpy as jnp
from jax.experimental import pallas as pl
from jax.experimental.pallas import tpu as pltpu


def _round_up(x, m):
    return ((x + m - 1) // m) * m


def _make_rcir_kernel(n_classes, n_knots, tile_rows):
    """Builds the fused softmax-max / argmax / interp1d kernel."""
    C = int(n_classes)
    K = int(n_knots)
    TN = int(tile_rows)
    CHUNK = 128
    n_chunks = TN // CHUNK

    def kernel(params_ref, logits_ref, cali_ref, pred_ref):
        # ---- hoisted constants (built once per grid step) -------------------
        eye = (jax.lax.broadcasted_iota(jnp.int32, (CHUNK, CHUNK), 0) ==
               jax.lax.broadcasted_iota(jnp.int32, (CHUNK, CHUNK), 1))
        lane_cls = jax.lax.broadcasted_iota(jnp.int32, (CHUNK, C), 1)

        # ---- knot scalars from SMEM (read once per grid step) ---------------
        # params layout: [kx(K), ky(K), slope(K-1), fill_below, fill_above]
        kx = [params_ref[0, j] for j in range(K)]
        ky = [params_ref[0, K + j] for j in range(K)]
        sl = [params_ref[0, 2 * K + j] for j in range(K - 1)]
        fill_lo = params_ref[0, 3 * K - 1]   # scipy interp1d _fill_value_below
        fill_hi = params_ref[0, 3 * K]       # scipy interp1d _fill_value_above

        # Process the row tile in 128-row chunks so per-row results can be
        # relayouted to 128 lanes and so in-flight temporaries stay small.
        for g in range(n_chunks):
            r0 = g * CHUNK
            x = logits_ref[r0:r0 + CHUNK, :].astype(jnp.float32)      # (128, C)

            # softmax max-prob + first-occurrence argmax (torch.max semantics)
            m = jnp.max(x, axis=-1, keepdims=True)                    # (128, 1)
            denom = jnp.sum(jnp.exp(x - m), axis=-1, keepdims=True)   # (128, 1)
            score_col = 1.0 / denom                                   # max softmax prob
            pred_col = jnp.min(jnp.where(x == m, lane_cls, C),
                               axis=-1, keepdims=True).astype(jnp.float32)

            # sublane -> lane relayout: place chunk row r on lane r via a
            # masked diagonal and an axis-0 sum (127 zeros + value => exact).
            s = jnp.sum(jnp.where(eye, score_col, 0.0),
                        axis=0, keepdims=True)                        # (1, 128)
            p = jnp.sum(jnp.where(eye, pred_col, 0.0),
                        axis=0, keepdims=True)                        # (1, 128)

            # piecewise-linear interpolation (scipy interp1d), select chain
            # over the K-1 segments, 128 lanes wide.
            res = ky[0] + (s - kx[0]) * sl[0]
            for j in range(1, K - 1):
                res = jnp.where(s >= kx[j], ky[j] + (s - kx[j]) * sl[j], res)
            res = jnp.where(s < kx[0], fill_lo, res)
            res = jnp.where(s > kx[K - 1], fill_hi, res)

            cali_ref[g:g + 1, :] = res
            pred_ref[g:g + 1, :] = p.astype(jnp.int32)

    return kernel


def rcir_forward_eval(validation_logits, validation_labels, knots_x, knots_y,
                      tile_rows=None):
    """Eval-mode forward of RCIR. Returns (cali_scores, predictions, labels)."""
    N, C = validation_logits.shape
    K = int(knots_x.shape[0])
    assert K >= 2, "interp1d model needs at least two knots"

    # ---- tile selection --------------------------------------------------
    # Single tile for small N; otherwise 1024-row tiles (keeps the lane-dense
    # output blocks (8, 128)-aligned and the grid splittable across cores).
    if tile_rows is None:
        if _round_up(N, 128) <= 1024:
            tile_rows = _round_up(N, 128)
        else:
            tile_rows = 1024
    tile_rows = int(tile_rows)
    assert tile_rows % 128 == 0
    n_pad = _round_up(N, tile_rows)
    num_tiles = n_pad // tile_rows
    assert num_tiles == 1 or tile_rows % 1024 == 0

    # Keep the logits in their incoming floating dtype (no wrapper upcast);
    # the kernel casts to f32 after the load.
    logits = validation_logits
    if not jnp.issubdtype(logits.dtype, jnp.floating):
        logits = logits.astype(jnp.float32)
    if n_pad != N:
        logits = jnp.pad(logits, ((0, n_pad - N), (0, 0)))

    # ---- knot parameters packed for SMEM ---------------------------------
    kx = knots_x.astype(jnp.float32)
    ky = knots_y.astype(jnp.float32)
    dx = kx[1:] - kx[:-1]
    slope = (ky[1:] - ky[:-1]) / jnp.where(dx == 0, 1.0, dx)  # guard 0-width bins
    params = jnp.concatenate(
        [kx, ky, slope, jnp.min(ky)[None], jnp.max(ky)[None]]
    ).reshape(1, 3 * K + 1)

    rows128 = n_pad // 128
    blk128 = tile_rows // 128

    # VMEM budget: double-buffered logits tile + double-buffered outputs +
    # per-chunk temporaries; stay well under every generation's physical VMEM
    # (v7x has only 64 MiB physical / 32 MiB scoped default).
    est_vmem = (2 * tile_rows * C * 4
                + 4 * tile_rows * 4
                + 4 * 128 * C * 4
                + (1 << 20))
    vmem_limit = int(min(64 * 1024 * 1024,
                         max(32 * 1024 * 1024, 2 * est_vmem)))

    kernel = _make_rcir_kernel(C, K, tile_rows)

    cali, pred = pl.pallas_call(
        kernel,
        out_shape=(jax.ShapeDtypeStruct((rows128, 128), jnp.float32),
                   jax.ShapeDtypeStruct((rows128, 128), jnp.int32)),
        grid_spec=pltpu.PrefetchScalarGridSpec(
            num_scalar_prefetch=0,
            grid=(num_tiles,),
            in_specs=[
                # knot parameters: small, resident in SMEM, read as scalars
                pl.BlockSpec(memory_space=pltpu.MemorySpace.SMEM),
                # logits row tile
                pl.BlockSpec((tile_rows, C), lambda i: (i, 0)),
            ],
            out_specs=[
                pl.BlockSpec((blk128, 128), lambda i: (i, 0)),  # calibrated scores
                pl.BlockSpec((blk128, 128), lambda i: (i, 0)),  # predictions
            ],
        ),
        compiler_params=pltpu.CompilerParams(
            dimension_semantics=("parallel",),
            vmem_limit_bytes=vmem_limit),
    )(params, logits)

    cali = cali.reshape(-1)[:N]
    pred = pred.reshape(-1)[:N]
    return cali, pred, validation_labels


if __name__ == "__main__":
    key = jax.random.PRNGKey(0)
    k_logits, k_labels = jax.random.split(key)

    N, C = 16, 32
    validation_logits = jax.random.normal(k_logits, (N, C), dtype=jnp.float32) * 2.0
    validation_labels = jax.random.randint(k_labels, (N,), 0, 2, dtype=jnp.int32)

    # Deterministic synthetic "best_model" interpolation knots (the shapes an
    # isotonic-regression-fit interp1d would have): strictly increasing x in
    # [0, 1], nondecreasing y in [0, 1].
    knots_x = jnp.array([0.03, 0.12, 0.25, 0.38, 0.52, 0.66, 0.80, 0.91, 1.00],
                        dtype=jnp.float32)
    knots_y = jnp.array([0.00, 0.05, 0.10, 0.22, 0.40, 0.55, 0.72, 0.88, 1.00],
                        dtype=jnp.float32)

    cali_scores, predictions, labels_out = rcir_forward_eval(
        validation_logits, validation_labels, knots_x, knots_y)
    jax.block_until_ready((cali_scores, predictions, labels_out))

    # Pure-JAX reference check.
    probs = jax.nn.softmax(validation_logits, axis=1)
    scores_ref = jnp.max(probs, axis=1)
    preds_ref = jnp.argmax(probs, axis=1).astype(jnp.int32)
    cali_ref = jnp.interp(scores_ref, knots_x, knots_y)

    assert jnp.allclose(cali_scores, cali_ref, atol=1e-5), (cali_scores, cali_ref)
    assert jnp.array_equal(predictions, preds_ref), (predictions, preds_ref)
    assert jnp.array_equal(labels_out, validation_labels)

    print("KERNEL_OK")
</pallas_src>

<mosaic_0001>
module attributes {stable_mosaic.version = 11 : i64} {
  func.func @kernel(%arg0: i32, %arg1: memref<1x28xf32, #tpu.memory_space<smem>>, %arg2: memref<128x32xf32, #tpu.memory_space<vmem>>, %arg3: memref<1x128xf32, #tpu.memory_space<vmem>>, %arg4: memref<1x128xi32, #tpu.memory_space<vmem>>) attributes {dimension_semantics = [#tpu.dimension_semantics<parallel>], iteration_bounds = array<i64: 1>, scalar_prefetch = 0 : i64, scratch_operands = 0 : i64, tpu.core_type = #tpu.core_type<tc>, window_params = [{transform_indices = @transform_0, window_bounds = array<i64: 1, 28>}, {transform_indices = @transform_1, window_bounds = array<i64: 128, 32>}, {transform_indices = @transform_2, window_bounds = array<i64: 1, 128>}, {transform_indices = @transform_3, window_bounds = array<i64: 1, 128>}]} {
    %0 = tpu.iota {dimensions = array<i32: 0>} : vector<128x128xi32>
    %1 = tpu.iota {dimensions = array<i32: 1>} : vector<128x128xi32>
    %2 = arith.cmpi eq, %0, %1 : vector<128x128xi32>
    %3 = tpu.iota {dimensions = array<i32: 1>} : vector<128x32xi32>
    %c0 = arith.constant 0 : index
    %c0_0 = arith.constant 0 : index
    %4 = memref.load %arg1[%c0, %c0_0] : memref<1x28xf32, #tpu.memory_space<smem>>
    %c0_1 = arith.constant 0 : index
    %c1 = arith.constant 1 : index
    %5 = memref.load %arg1[%c0_1, %c1] : memref<1x28xf32, #tpu.memory_space<smem>>
    %c0_2 = arith.constant 0 : index
    %c2 = arith.constant 2 : index
    %6 = memref.load %arg1[%c0_2, %c2] : memref<1x28xf32, #tpu.memory_space<smem>>
    %c0_3 = arith.constant 0 : index
    %c3 = arith.constant 3 : index
    %7 = memref.load %arg1[%c0_3, %c3] : memref<1x28xf32, #tpu.memory_space<smem>>
    %c0_4 = arith.constant 0 : index
    %c4 = arith.constant 4 : index
    %8 = memref.load %arg1[%c0_4, %c4] : memref<1x28xf32, #tpu.memory_space<smem>>
    %c0_5 = arith.constant 0 : index
    %c5 = arith.constant 5 : index
    %9 = memref.load %arg1[%c0_5, %c5] : memref<1x28xf32, #tpu.memory_space<smem>>
    %c0_6 = arith.constant 0 : index
    %c6 = arith.constant 6 : index
    %10 = memref.load %arg1[%c0_6, %c6] : memref<1x28xf32, #tpu.memory_space<smem>>
    %c0_7 = arith.constant 0 : index
    %c7 = arith.constant 7 : index
    %11 = memref.load %arg1[%c0_7, %c7] : memref<1x28xf32, #tpu.memory_space<smem>>
    %c0_8 = arith.constant 0 : index
    %c8 = arith.constant 8 : index
    %12 = memref.load %arg1[%c0_8, %c8] : memref<1x28xf32, #tpu.memory_space<smem>>
    %c0_9 = arith.constant 0 : index
    %c9 = arith.constant 9 : index
    %13 = memref.load %arg1[%c0_9, %c9] : memref<1x28xf32, #tpu.memory_space<smem>>
    %c0_10 = arith.constant 0 : index
    %c10 = arith.constant 10 : index
    %14 = memref.load %arg1[%c0_10, %c10] : memref<1x28xf32, #tpu.memory_space<smem>>
    %c0_11 = arith.constant 0 : index
    %c11 = arith.constant 11 : index
    %15 = memref.load %arg1[%c0_11, %c11] : memref<1x28xf32, #tpu.memory_space<smem>>
    %c0_12 = arith.constant 0 : index
    %c12 = arith.constant 12 : index
    %16 = memref.load %arg1[%c0_12, %c12] : memref<1x28xf32, #tpu.memory_space<smem>>
    %c0_13 = arith.constant 0 : index
    %c13 = arith.constant 13 : index
    %17 = memref.load %arg1[%c0_13, %c13] : memref<1x28xf32, #tpu.memory_space<smem>>
    %c0_14 = arith.constant 0 : index
    %c14 = arith.constant 14 : index
    %18 = memref.load %arg1[%c0_14, %c14] : memref<1x28xf32, #tpu.memory_space<smem>>
    %c0_15 = arith.constant 0 : index
    %c15 = arith.constant 15 : index
    %19 = memref.load %arg1[%c0_15, %c15] : memref<1x28xf32, #tpu.memory_space<smem>>
    %c0_16 = arith.constant 0 : index
    %c16 = arith.constant 16 : index
    %20 = memref.load %arg1[%c0_16, %c16] : memref<1x28xf32, #tpu.memory_space<smem>>
    %c0_17 = arith.constant 0 : index
    %c18 = arith.constant 18 : index
    %21 = memref.load %arg1[%c0_17, %c18] : memref<1x28xf32, #tpu.memory_space<smem>>
    %c0_18 = arith.constant 0 : index
    %c19 = arith.constant 19 : index
    %22 = memref.load %arg1[%c0_18, %c19] : memref<1x28xf32, #tpu.memory_space<smem>>
    %c0_19 = arith.constant 0 : index
    %c20 = arith.constant 20 : index
    %23 = memref.load %arg1[%c0_19, %c20] : memref<1x28xf32, #tpu.memory_space<smem>>
    %c0_20 = arith.constant 0 : index
    %c21 = arith.constant 21 : index
    %24 = memref.load %arg1[%c0_20, %c21] : memref<1x28xf32, #tpu.memory_space<smem>>
    %c0_21 = arith.constant 0 : index
    %c22 = arith.constant 22 : index
    %25 = memref.load %arg1[%c0_21, %c22] : memref<1x28xf32, #tpu.memory_space<smem>>
    %c0_22 = arith.constant 0 : index
    %c23 = arith.constant 23 : index
    %26 = memref.load %arg1[%c0_22, %c23] : memref<1x28xf32, #tpu.memory_space<smem>>
    %c0_23 = arith.constant 0 : index
    %c24 = arith.constant 24 : index
    %27 = memref.load %arg1[%c0_23, %c24] : memref<1x28xf32, #tpu.memory_space<smem>>
    %c0_24 = arith.constant 0 : index
    %c25 = arith.constant 25 : index
    %28 = memref.load %arg1[%c0_24, %c25] : memref<1x28xf32, #tpu.memory_space<smem>>
    %c0_25 = arith.constant 0 : index
    %c26 = arith.constant 26 : index
    %29 = memref.load %arg1[%c0_25, %c26] : memref<1x28xf32, #tpu.memory_space<smem>>
    %c0_26 = arith.constant 0 : index
    %c27 = arith.constant 27 : index
    %30 = memref.load %arg1[%c0_26, %c27] : memref<1x28xf32, #tpu.memory_space<smem>>
    %c0_27 = arith.constant 0 : index
    %c0_28 = arith.constant 0 : index
    %31 = vector.load %arg2[%c0_27, %c0_28] : memref<128x32xf32, #tpu.memory_space<vmem>>, vector<128x32xf32>
    %cst = arith.constant dense<0xFF800000> : vector<128xf32>
    %32 = vector.multi_reduction <maximumf>, %31, %cst [1] : vector<128x32xf32> to vector<128xf32>
    %33 = vector.shape_cast %32 : vector<128xf32> to vector<128x1xf32>
    %34 = vector.broadcast %33 : vector<128x1xf32> to vector<128x32xf32>
    %35 = arith.subf %31, %34 : vector<128x32xf32>
    %36 = math.exp %35 : vector<128x32xf32>
    %cst_29 = arith.constant dense<0.000000e+00> : vector<128xf32>
    %37 = vector.multi_reduction <add>, %36, %cst_29 [1] : vector<128x32xf32> to vector<128xf32>
    %38 = vector.shape_cast %37 : vector<128xf32> to vector<128x1xf32>
    %cst_30 = arith.constant 1.000000e+00 : f32
    %39 = vector.broadcast %cst_30 : f32 to vector<128x1xf32>
    %40 = arith.divf %39, %38 : vector<128x1xf32>
    %41 = vector.broadcast %33 : vector<128x1xf32> to vector<128x32xf32>
    %42 = arith.cmpf oeq, %31, %41 : vector<128x32xf32>
    %c32_i32 = arith.constant 32 : i32
    %43 = vector.broadcast %c32_i32 : i32 to vector<128x32xi32>
    %44 = arith.select %42, %3, %43 : vector<128x32xi1>, vector<128x32xi32>
    %cst_31 = arith.constant dense<2147483647> : vector<128xi32>
    %45 = vector.multi_reduction <minsi>, %44, %cst_31 [1] : vector<128x32xi32> to vector<128xi32>
    %46 = vector.shape_cast %45 : vector<128xi32> to vector<128x1xi32>
    %47 = arith.sitofp %46 : vector<128x1xi32> to vector<128x1xf32>
    %cst_32 = arith.constant 0.000000e+00 : f32
    %48 = vector.shape_cast %40 : vector<128x1xf32> to vector<128x1xf32>
    %49 = vector.broadcast %48 : vector<128x1xf32> to vector<128x128xf32>
    %50 = vector.broadcast %cst_32 : f32 to vector<128x128xf32>
    %51 = arith.select %2, %49, %50 : vector<128x128xi1>, vector<128x128xf32>
    %cst_33 = arith.constant dense<0.000000e+00> : vector<128xf32>
    %52 = vector.multi_reduction <add>, %51, %cst_33 [0] : vector<128x128xf32> to vector<128xf32>
    %53 = vector.shape_cast %52 : vector<128xf32> to vector<1x128xf32>
    %cst_34 = arith.constant 0.000000e+00 : f32
    %54 = vector.shape_cast %47 : vector<128x1xf32> to vector<128x1xf32>
    %55 = vector.broadcast %54 : vector<128x1xf32> to vector<128x128xf32>
    %56 = vector.broadcast %cst_34 : f32 to vector<128x128xf32>
    %57 = arith.select %2, %55, %56 : vector<128x128xi1>, vector<128x128xf32>
    %cst_35 = arith.constant dense<0.000000e+00> : vector<128xf32>
    %58 = vector.multi_reduction <add>, %57, %cst_35 [0] : vector<128x128xf32> to vector<128xf32>
    %59 = vector.shape_cast %58 : vector<128xf32> to vector<1x128xf32>
    %60 = vector.broadcast %4 : f32 to vector<1x128xf32>
    %61 = arith.subf %53, %60 : vector<1x128xf32>
    %62 = vector.broadcast %21 : f32 to vector<1x128xf32>
    %63 = arith.mulf %61, %62 : vector<1x128xf32>
    %64 = vector.broadcast %13 : f32 to vector<1x128xf32>
    %65 = arith.addf %64, %63 : vector<1x128xf32>
    %66 = vector.broadcast %5 : f32 to vector<1x128xf32>
    %67 = arith.cmpf oge, %53, %66 : vector<1x128xf32>
    %68 = vector.broadcast %5 : f32 to vector<1x128xf32>
    %69 = arith.subf %53, %68 : vector<1x128xf32>
    %70 = vector.broadcast %22 : f32 to vector<1x128xf32>
    %71 = arith.mulf %69, %70 : vector<1x128xf32>
    %72 = vector.broadcast %14 : f32 to vector<1x128xf32>
    %73 = arith.addf %72, %71 : vector<1x128xf32>
    %74 = arith.select %67, %73, %65 : vector<1x128xi1>, vector<1x128xf32>
    %75 = vector.broadcast %6 : f32 to vector<1x128xf32>
    %76 = arith.cmpf oge, %53, %75 : vector<1x128xf32>
    %77 = vector.broadcast %6 : f32 to vector<1x128xf32>
    %78 = arith.subf %53, %77 : vector<1x128xf32>
    %79 = vector.broadcast %23 : f32 to vector<1x128xf32>
    %80 = arith.mulf %78, %79 : vector<1x128xf32>
    %81 = vector.broadcast %15 : f32 to vector<1x128xf32>
    %82 = arith.addf %81, %80 : vector<1x128xf32>
    %83 = arith.select %76, %82, %74 : vector<1x128xi1>, vector<1x128xf32>
    %84 = vector.broadcast %7 : f32 to vector<1x128xf32>
    %85 = arith.cmpf oge, %53, %84 : vector<1x128xf32>
    %86 = vector.broadcast %7 : f32 to vector<1x128xf32>
    %87 = arith.subf %53, %86 : vector<1x128xf32>
    %88 = vector.broadcast %24 : f32 to vector<1x128xf32>
    %89 = arith.mulf %87, %88 : vector<1x128xf32>
    %90 = vector.broadcast %16 : f32 to vector<1x128xf32>
    %91 = arith.addf %90, %89 : vector<1x128xf32>
    %92 = arith.select %85, %91, %83 : vector<1x128xi1>, vector<1x128xf32>
    %93 = vector.broadcast %8 : f32 to vector<1x128xf32>
    %94 = arith.cmpf oge, %53, %93 : vector<1x128xf32>
    %95 = vector.broadcast %8 : f32 to vector<1x128xf32>
    %96 = arith.subf %53, %95 : vector<1x128xf32>
    %97 = vector.broadcast %25 : f32 to vector<1x128xf32>
    %98 = arith.mulf %96, %97 : vector<1x128xf32>
    %99 = vector.broadcast %17 : f32 to vector<1x128xf32>
    %100 = arith.addf %99, %98 : vector<1x128xf32>
    %101 = arith.select %94, %100, %92 : vector<1x128xi1>, vector<1x128xf32>
    %102 = vector.broadcast %9 : f32 to vector<1x128xf32>
    %103 = arith.cmpf oge, %53, %102 : vector<1x128xf32>
    %104 = vector.broadcast %9 : f32 to vector<1x128xf32>
    %105 = arith.subf %53, %104 : vector<1x128xf32>
    %106 = vector.broadcast %26 : f32 to vector<1x128xf32>
    %107 = arith.mulf %105, %106 : vector<1x128xf32>
    %108 = vector.broadcast %18 : f32 to vector<1x128xf32>
    %109 = arith.addf %108, %107 : vector<1x128xf32>
    %110 = arith.select %103, %109, %101 : vector<1x128xi1>, vector<1x128xf32>
    %111 = vector.broadcast %10 : f32 to vector<1x128xf32>
    %112 = arith.cmpf oge, %53, %111 : vector<1x128xf32>
    %113 = vector.broadcast %10 : f32 to vector<1x128xf32>
    %114 = arith.subf %53, %113 : vector<1x128xf32>
    %115 = vector.broadcast %27 : f32 to vector<1x128xf32>
    %116 = arith.mulf %114, %115 : vector<1x128xf32>
    %117 = vector.broadcast %19 : f32 to vector<1x128xf32>
    %118 = arith.addf %117, %116 : vector<1x128xf32>
    %119 = arith.select %112, %118, %110 : vector<1x128xi1>, vector<1x128xf32>
    %120 = vector.broadcast %11 : f32 to vector<1x128xf32>
    %121 = arith.cmpf oge, %53, %120 : vector<1x128xf32>
    %122 = vector.broadcast %11 : f32 to vector<1x128xf32>
    %123 = arith.subf %53, %122 : vector<1x128xf32>
    %124 = vector.broadcast %28 : f32 to vector<1x128xf32>
    %125 = arith.mulf %123, %124 : vector<1x128xf32>
    %126 = vector.broadcast %20 : f32 to vector<1x128xf32>
    %127 = arith.addf %126, %125 : vector<1x128xf32>
    %128 = arith.select %121, %127, %119 : vector<1x128xi1>, vector<1x128xf32>
    %129 = vector.broadcast %4 : f32 to vector<1x128xf32>
    %130 = arith.cmpf olt, %53, %129 : vector<1x128xf32>
    %131 = vector.broadcast %29 : f32 to vector<1x128xf32>
    %132 = arith.select %130, %131, %128 : vector<1x128xi1>, vector<1x128xf32>
    %133 = vector.broadcast %12 : f32 to vector<1x128xf32>
    %134 = arith.cmpf ogt, %53, %133 : vector<1x128xf32>
    %135 = vector.broadcast %30 : f32 to vector<1x128xf32>
    %136 = arith.select %134, %135, %132 : vector<1x128xi1>, vector<1x128xf32>
    %c0_36 = arith.constant 0 : index
    %c0_37 = arith.constant 0 : index
    %137 = vector.load %arg3[%c0_36, %c0_37] : memref<1x128xf32, #tpu.memory_space<vmem>>, vector<1x128xf32>
    tpu.vector_store %arg3[%c0_36, %c0_37], %136 {strides = array<i32>} : memref<1x128xf32, #tpu.memory_space<vmem>>, vector<1x128xf32>,
    %138 = arith.fptosi %59 : vector<1x128xf32> to vector<1x128xi32>
    %c0_38 = arith.constant 0 : index
    %c0_39 = arith.constant 0 : index
    %139 = vector.load %arg4[%c0_38, %c0_39] : memref<1x128xi32, #tpu.memory_space<vmem>>, vector<1x128xi32>
    tpu.vector_store %arg4[%c0_38, %c0_39], %138 {strides = array<i32>} : memref<1x128xi32, #tpu.memory_space<vmem>>, vector<1x128xi32>,
    return
  }
  func.func @transform_0(%arg0: i32) -> (i32, i32) {
    %c0_i32 = arith.constant 0 : i32
    %c0_i32_0 = arith.constant 0 : i32
    %c0_i32_1 = arith.constant 0 : i32
    return %c0_i32, %c0_i32_0 : i32, i32
  }
  func.func @transform_1(%arg0: i32) -> (i32, i32) {
    %c0_i32 = arith.constant 0 : i32
    %c0_i32_0 = arith.constant 0 : i32
    return %arg0, %c0_i32 : i32, i32
  }
  func.func @transform_2(%arg0: i32) -> (i32, i32) {
    %c0_i32 = arith.constant 0 : i32
    %c0_i32_0 = arith.constant 0 : i32
    return %arg0, %c0_i32 : i32, i32
  }
  func.func @transform_3(%arg0: i32) -> (i32, i32) {
    %c0_i32 = arith.constant 0 : i32
    %c0_i32_0 = arith.constant 0 : i32
    return %arg0, %c0_i32 : i32, i32
  }
}

</mosaic_0001>

<llo_original>
// kernel: tpu_custom_call.1
$region0: #{tpu_custom_call.1}
  #allocation0 [shape = 'u32[]', space=smem, size = 0x4, offset = 0x4, fixed_abs, tag = 'smem constant byte address 0x4 - core index']
  #allocation1 [shape = 'u32[72,128]{1,0:T(1,128)}', space=vmem, size = 0x9000, scoped, tag = 'internal scratch']
  %s0 = inlined_call_operand.vmem [shape: f32[1,28], index: 0, kind: input, shape index: {}]
  %s1 = inlined_call_operand.vmem [shape: f32[128,32], index: 1, kind: input, shape index: {}]
  %s2 = inlined_call_operand.hbm [shape: f32[1,128], index: 2, kind: output, shape index: {0}]
  %s3 = inlined_call_operand.hbm [shape: s32[1,128], index: 3, kind: output, shape index: {1}]
  %4 = xla_tuple %s2, %s3
  %s5 = sld [smem:[#allocation0]]
  $region30: #{tpu_custom_call.1} parent=0
    _
  %s7 = ssub.s32 1, %s5
  %s8 = scalar_select 0, %s7, %s5
  $region1: #{tpu_custom_call.1} parent=0
    #allocation2 [shape = 'u8[512]{0}', space=smem, size = 0x200, scoped, tag = 'input window, operand 0, single buffered']
    #allocation3 [shape = 's32[1]{0}', space=sflag, size = 0x4, scoped, tag = 'scoped memory for tpu_custom_call.1']
    #allocation4 [shape = 's32[1]{0}', space=sflag, size = 0x4, scoped, tag = 'scoped memory for tpu_custom_call.1']
    #allocation5 [shape = 'u8[512]{0}', space=vmem, size = 0x400, scoped, tag = 'output window, operand 0, single buffered']
    #allocation6 [shape = 'u8[512]{0}', space=vmem, size = 0x400, scoped, tag = 'output window, operand 1, single buffered']
    #allocation7 [shape = 's32[1]{0}', space=sflag, size = 0x4, scoped, tag = 'scoped memory for tpu_custom_call.1']
    %9 = vsyncpa [#allocation4], 0
    %10 = vsyncpa [#allocation3], 0
    %11 = vsyncpa [#allocation7], 0
    // Predicated region
    $region2: #{tpu_custom_call.1} parent=1 // pred_check
      _
    $region3: #{tpu_custom_call.1} parent=1 // pred_check_branch
      %13 = sbr.rel (0) target = $region5
    $region4: #{tpu_custom_call.1} parent=1 // pred_region
      %15 = vsyncadd [#allocation4], 0
      %s17 = sshll.u32 %s0, 4
      %s18 = int_to_ptr.vmem [resolvable:$true] %s17
      %20 = dma.vmem_to_smem %s18, 16, [#allocation2], [#allocation4]
    $region5: #{tpu_custom_call.1} parent=1 // pred_fallthru
      _
    // Predicated region
    $region6: #{tpu_custom_call.1} parent=1 // pred_check
      _
    $region7: #{tpu_custom_call.1} parent=1 // pred_check_branch
      %22 = sbr.rel (0) target = $region9
    $region8: #{tpu_custom_call.1} parent=1 // pred_region
      _
    $region9: #{tpu_custom_call.1} parent=1 // pred_fallthru
      _
    // Predicated region
    $region10: #{tpu_custom_call.1} parent=1 // pred_check
      _
    $region11: #{tpu_custom_call.1} parent=1 // pred_check_branch
      %24 = sbr.rel (0) target = $region13
    $region12: #{tpu_custom_call.1} parent=1 // pred_region
      %26 = dma.done [#allocation4], 16
    $region13: #{tpu_custom_call.1} parent=1 // pred_fallthru
      _
    %27 = sfence
    %v28 = vlaneseq
    %v29 = vshrl.u32 %v28, 7
    %v30 = vadd.s32 %v29, 8
    %v31 = vadd.s32 %v29, 16
    %v32 = vadd.s32 %v29, 24
    %v33 = vadd.s32 %v29, 32
    %v34 = vadd.s32 %v29, 40
    %v35 = vadd.s32 %v29, 48
    %v36 = vadd.s32 %v29, 56
    %v37 = vadd.s32 %v29, 64
    %v38 = vadd.s32 %v29, 72
    %v39 = vadd.s32 %v29, 80
    %v40 = vadd.s32 %v29, 88
    %v41 = vadd.s32 %v29, 96
    %v42 = vadd.s32 %v29, 104
    %v43 = vadd.s32 %v29, 112
    %v44 = vadd.s32 %v29, 120
    %v45 = vlaneseq
    %v46 = vand.u32 %v45, 127
    %vm47 = vcmp.eq.s32.totalorder %v29, %v46
    %vm48 = vcmp.eq.s32.totalorder %v30, %v46
    %vm49 = vcmp.eq.s32.totalorder %v31, %v46
    %vm50 = vcmp.eq.s32.totalorder %v32, %v46
    %vm51 = vcmp.eq.s32.totalorder %v33, %v46
    %vm52 = vcmp.eq.s32.totalorder %v34, %v46
    %vm53 = vcmp.eq.s32.totalorder %v35, %v46
    %vm54 = vcmp.eq.s32.totalorder %v36, %v46
    %vm55 = vcmp.eq.s32.totalorder %v37, %v46
    %vm56 = vcmp.eq.s32.totalorder %v38, %v46
    %vm57 = vcmp.eq.s32.totalorder %v39, %v46
    %vm58 = vcmp.eq.s32.totalorder %v40, %v46
    %vm59 = vcmp.eq.s32.totalorder %v41, %v46
    %vm60 = vcmp.eq.s32.totalorder %v42, %v46
    %vm61 = vcmp.eq.s32.totalorder %v43, %v46
    %vm62 = vcmp.eq.s32.totalorder %v44, %v46
    %s63 = sld [smem:[#allocation2]]
    %s64 = sld [smem:[#allocation2 + $0x1]]
    %s65 = sld [smem:[#allocation2 + $0x2]]
    %s66 = sld [smem:[#allocation2 + $0x3]]
    %s67 = sld [smem:[#allocation2 + $0x4]]
    %s68 = sld [smem:[#allocation2 + $0x5]]
    %s69 = sld [smem:[#allocation2 + $0x6]]
    %s70 = sld [smem:[#allocation2 + $0x7]]
    %s71 = sld [smem:[#allocation2 + $0x8]]
    %s72 = sld [smem:[#allocation2 + $0x9]]
    %s73 = sld [smem:[#allocation2 + $0xa]]
    %s74 = sld [smem:[#allocation2 + $0xb]]
    %s75 = sld [smem:[#allocation2 + $0xc]]
    %s76 = sld [smem:[#allocation2 + $0xd]]
    %s77 = sld [smem:[#allocation2 + $0xe]]
    %s78 = sld [smem:[#allocation2 + $0xf]]
    %s79 = sld [smem:[#allocation2 + $0x10]]
    %s80 = sld [smem:[#allocation2 + $0x12]]
    %s81 = sld [smem:[#allocation2 + $0x13]]
    %s82 = sld [smem:[#allocation2 + $0x14]]
    %s83 = sld [smem:[#allocation2 + $0x15]]
    %s84 = sld [smem:[#allocation2 + $0x16]]
    %s85 = sld [smem:[#allocation2 + $0x17]]
    %s86 = sld [smem:[#allocation2 + $0x18]]
    %s87 = sld [smem:[#allocation2 + $0x19]]
    %s88 = sld [smem:[#allocation2 + $0x1a]]
    %s89 = sld [smem:[#allocation2 + $0x1b]]
    %v90 = vld [vmem:[%s1] sm:$0xff]
    %v91 = vld [vmem:[%s1 + $0x8] sm:$0xff]
    %v92 = vld [vmem:[%s1 + $0x10] sm:$0xff]
    %v93 = vld [vmem:[%s1 + $0x18] sm:$0xff]
    %v94 = vld [vmem:[%s1 + $0x20] sm:$0xff]
    %v95 = vld [vmem:[%s1 + $0x28] sm:$0xff]
    %v96 = vld [vmem:[%s1 + $0x30] sm:$0xff]
    %v97 = vld [vmem:[%s1 + $0x38] sm:$0xff]
    %v98 = vld [vmem:[%s1 + $0x40] sm:$0xff]
    %v99 = vld [vmem:[%s1 + $0x48] sm:$0xff]
    %v100 = vld [vmem:[%s1 + $0x50] sm:$0xff]
    %v101 = vld [vmem:[%s1 + $0x58] sm:$0xff]
    %v102 = vld [vmem:[%s1 + $0x60] sm:$0xff]
    %v103 = vld [vmem:[%s1 + $0x68] sm:$0xff]
    %v104 = vld [vmem:[%s1 + $0x70] sm:$0xff]
    %v105 = vld [vmem:[%s1 + $0x78] sm:$0xff]
    %vm106 = vcmask 261120
    %v107 = vsel %vm106, %v90, -inf
    %108 = vmax.xlane.f32.xlu0 %v107
    %v109 = vpop.xlane.xlu0 %108
    %v110 = vsel %vm106, %v91, -inf
    %111 = vmax.xlane.f32.xlu0 %v110
    %v112 = vpop.xlane.xlu0 %111
    %v113 = vsel %vm106, %v92, -inf
    %114 = vmax.xlane.f32.xlu0 %v113
    %v115 = vpop.xlane.xlu0 %114
    %v116 = vsel %vm106, %v93, -inf
    %117 = vmax.xlane.f32.xlu0 %v116
    %v118 = vpop.xlane.xlu0 %117
    %v119 = vsel %vm106, %v94, -inf
    %120 = vmax.xlane.f32.xlu0 %v119
    %v121 = vpop.xlane.xlu0 %120
    %v122 = vsel %vm106, %v95, -inf
    %123 = vmax.xlane.f32.xlu0 %v122
    %v124 = vpop.xlane.xlu0 %123
    %v125 = vsel %vm106, %v96, -inf
    %126 = vmax.xlane.f32.xlu0 %v125
    %v127 = vpop.xlane.xlu0 %126
    %v128 = vsel %vm106, %v97, -inf
    %129 = vmax.xlane.f32.xlu0 %v128
    %v130 = vpop.xlane.xlu0 %129
    %v131 = vsel %vm106, %v98, -inf
    %132 = vmax.xlane.f32.xlu0 %v131
    %v133 = vpop.xlane.xlu0 %132
    %v134 = vsel %vm106, %v99, -inf
    %135 = vmax.xlane.f32.xlu0 %v134
    %v136 = vpop.xlane.xlu0 %135
    %v137 = vsel %vm106, %v100, -inf
    %138 = vmax.xlane.f32.xlu0 %v137
    %v139 = vpop.xlane.xlu0 %138
    %v140 = vsel %vm106, %v101, -inf
    %141 = vmax.xlane.f32.xlu0 %v140
    %v142 = vpop.xlane.xlu0 %141
    %v143 = vsel %vm106, %v102, -inf
    %144 = vmax.xlane.f32.xlu0 %v143
    %v145 = vpop.xlane.xlu0 %144
    %v146 = vsel %vm106, %v103, -inf
    %147 = vmax.xlane.f32.xlu0 %v146
    %v148 = vpop.xlane.xlu0 %147
    %v149 = vsel %vm106, %v104, -inf
    %150 = vmax.xlane.f32.xlu0 %v149
    %v151 = vpop.xlane.xlu0 %150
    %v152 = vsel %vm106, %v105, -inf
    %153 = vmax.xlane.f32.xlu0 %v152
    %v154 = vpop.xlane.xlu0 %153
    %v155 = vsub.f32 %v90, %v109
    %v156 = vsub.f32 %v91, %v112
    %v157 = vsub.f32 %v92, %v115
    %v158 = vsub.f32 %v93, %v118
    %v159 = vsub.f32 %v94, %v121
    %v160 = vsub.f32 %v95, %v124
    %v161 = vsub.f32 %v96, %v127
    %v162 = vsub.f32 %v97, %v130
    %v163 = vsub.f32 %v98, %v133
    %v164 = vsub.f32 %v99, %v136
    %v165 = vsub.f32 %v100, %v139
    %v166 = vsub.f32 %v101, %v142
    %v167 = vsub.f32 %v102, %v145
    %v168 = vsub.f32 %v103, %v148
    %v169 = vsub.f32 %v104, %v151
    %v170 = vsub.f32 %v105, %v154
    %v171 = vmul.f32 %v155, 1.442695
    %v172 = vpow.pop %v171
    %v173 = vmul.f32 %v156, 1.442695
    %v174 = vpow.pop %v173
    %v175 = vmul.f32 %v157, 1.442695
    %v176 = vpow.pop %v175
    %v177 = vmul.f32 %v158, 1.442695
    %v178 = vpow.pop %v177
    %v179 = vmul.f32 %v159, 1.442695
    %v180 = vpow.pop %v179
    %v181 = vmul.f32 %v160, 1.442695
    %v182 = vpow.pop %v181
    %v183 = vmul.f32 %v161, 1.442695
    %v184 = vpow.pop %v183
    %v185 = vmul.f32 %v162, 1.442695
    %v186 = vpow.pop %v185
    %v187 = vmul.f32 %v163, 1.442695
    %v188 = vpow.pop %v187
    %v189 = vmul.f32 %v164, 1.442695
    %v190 = vpow.pop %v189
    %v191 = vmul.f32 %v165, 1.442695
    %v192 = vpow.pop %v191
    %v193 = vmul.f32 %v166, 1.442695
    %v194 = vpow.pop %v193
    %v195 = vmul.f32 %v167, 1.442695
    %v196 = vpow.pop %v195
    %v197 = vmul.f32 %v168, 1.442695
    %v198 = vpow.pop %v197
    %v199 = vmul.f32 %v169, 1.442695
    %v200 = vpow.pop %v199
    %v201 = vmul.f32 %v170, 1.442695
    %v202 = vpow.pop %v201
    %v203 = vsel %vm106, %v172, 0.0
    %204 = vadd.xlane.f32.xlu0 %v203
    %v205 = vpop.xlane.xlu0 %204
    %v206 = vsel %vm106, %v174, 0.0
    %207 = vadd.xlane.f32.xlu0 %v206
    %v208 = vpop.xlane.xlu0 %207
    %v209 = vsel %vm106, %v176, 0.0
    %210 = vadd.xlane.f32.xlu0 %v209
    %v211 = vpop.xlane.xlu0 %210
    %v212 = vsel %vm106, %v178, 0.0
    %213 = vadd.xlane.f32.xlu0 %v212
    %v214 = vpop.xlane.xlu0 %213
    %v215 = vsel %vm106, %v180, 0.0
    %216 = vadd.xlane.f32.xlu0 %v215
    %v217 = vpop.xlane.xlu0 %216
    %v218 = vsel %vm106, %v182, 0.0
    %219 = vadd.xlane.f32.xlu0 %v218
    %v220 = vpop.xlane.xlu0 %219
    %v221 = vsel %vm106, %v184, 0.0
    %222 = vadd.xlane.f32.xlu0 %v221
    %v223 = vpop.xlane.xlu0 %222
    %v224 = vsel %vm106, %v186, 0.0
    %225 = vadd.xlane.f32.xlu0 %v224
    %v226 = vpop.xlane.xlu0 %225
    %v227 = vsel %vm106, %v188, 0.0
    %228 = vadd.xlane.f32.xlu0 %v227
    %v229 = vpop.xlane.xlu0 %228
    %v230 = vsel %vm106, %v190, 0.0
    %231 = vadd.xlane.f32.xlu0 %v230
    %v232 = vpop.xlane.xlu0 %231
    %v233 = vsel %vm106, %v192, 0.0
    %234 = vadd.xlane.f32.xlu0 %v233
    %v235 = vpop.xlane.xlu0 %234
    %v236 = vsel %vm106, %v194, 0.0
    %237 = vadd.xlane.f32.xlu0 %v236
    %v238 = vpop.xlane.xlu0 %237
    %v239 = vsel %vm106, %v196, 0.0
    %240 = vadd.xlane.f32.xlu0 %v239
    %v241 = vpop.xlane.xlu0 %240
    %v242 = vsel %vm106, %v198, 0.0
    %243 = vadd.xlane.f32.xlu0 %v242
    %v244 = vpop.xlane.xlu0 %243
    %v245 = vsel %vm106, %v200, 0.0
    %246 = vadd.xlane.f32.xlu0 %v245
    %v247 = vpop.xlane.xlu0 %246
    %v248 = vsel %vm106, %v202, 0.0
    %249 = vadd.xlane.f32.xlu0 %v248
    %v250 = vpop.xlane.xlu0 %249
    %v251 = vrcp.pop %v205
    %v252 = vmul.f32 %v205, %v251
    %v253 = vsub.f32 1.0, %v252
    %v254 = vmul.f32 %v251, %v253
    %v255 = vadd.f32 %v251, %v254
    %vm256 = vweird.f32 %v205
    %vm257 = vweird.f32 %v251
    %vm258 = vmor %vm256, %vm257
    %v259 = vsel %vm258, %v251, %v255
    %v260 = vand.u32 2147483647, %v205
    %vm261 = vcmp.eq.f32.partialorder %v260, 8.507059e+37
    %v262 = vand.u32 %v205, 2147483648
    %v263 = vor.u32 1.1754944e-38, %v262
    %v264 = vsel %vm261, %v263, %v259
    %v265 = vmul.f32 1.0, %v264
    %v266 = vrcp.pop %v208
    %v267 = vmul.f32 %v208, %v266
    %v268 = vsub.f32 1.0, %v267
    %v269 = vmul.f32 %v266, %v268
    %v270 = vadd.f32 %v266, %v269
    %vm271 = vweird.f32 %v208
    %vm272 = vweird.f32 %v266
    %vm273 = vmor %vm271, %vm272
    %v274 = vsel %vm273, %v266, %v270
    %v275 = vand.u32 2147483647, %v208
    %vm276 = vcmp.eq.f32.partialorder %v275, 8.507059e+37
    %v277 = vand.u32 %v208, 2147483648
    %v278 = vor.u32 1.1754944e-38, %v277
    %v279 = vsel %vm276, %v278, %v274
    %v280 = vmul.f32 1.0, %v279
    %v281 = vrcp.pop %v211
    %v282 = vmul.f32 %v211, %v281
    %v283 = vsub.f32 1.0, %v282
    %v284 = vmul.f32 %v281, %v283
    %v285 = vadd.f32 %v281, %v284
    %vm286 = vweird.f32 %v211
    %vm287 = vweird.f32 %v281
    %vm288 = vmor %vm286, %vm287
    %v289 = vsel %vm288, %v281, %v285
    %v290 = vand.u32 2147483647, %v211
    %vm291 = vcmp.eq.f32.partialorder %v290, 8.507059e+37
    %v292 = vand.u32 %v211, 2147483648
    %v293 = vor.u32 1.1754944e-38, %v292
    %v294 = vsel %vm291, %v293, %v289
    %v295 = vmul.f32 1.0, %v294
    %v296 = vrcp.pop %v214
    %v297 = vmul.f32 %v214, %v296
    %v298 = vsub.f32 1.0, %v297
    %v299 = vmul.f32 %v296, %v298
    %v300 = vadd.f32 %v296, %v299
    %vm301 = vweird.f32 %v214
    %vm302 = vweird.f32 %v296
    %vm303 = vmor %vm301, %vm302
    %v304 = vsel %vm303, %v296, %v300
    %v305 = vand.u32 2147483647, %v214
    %vm306 = vcmp.eq.f32.partialorder %v305, 8.507059e+37
    %v307 = vand.u32 %v214, 2147483648
    %v308 = vor.u32 1.1754944e-38, %v307
    %v309 = vsel %vm306, %v308, %v304
    %v310 = vmul.f32 1.0, %v309
    %v311 = vrcp.pop %v217
    %v312 = vmul.f32 %v217, %v311
    %v313 = vsub.f32 1.0, %v312
    %v314 = vmul.f32 %v311, %v313
    %v315 = vadd.f32 %v311, %v314
    %vm316 = vweird.f32 %v217
    %vm317 = vweird.f32 %v311
    %vm318 = vmor %vm316, %vm317
    %v319 = vsel %vm318, %v311, %v315
    %v320 = vand.u32 2147483647, %v217
    %vm321 = vcmp.eq.f32.partialorder %v320, 8.507059e+37
    %v322 = vand.u32 %v217, 2147483648
    %v323 = vor.u32 1.1754944e-38, %v322
    %v324 = vsel %vm321, %v323, %v319
    %v325 = vmul.f32 1.0, %v324
    %v326 = vrcp.pop %v220
    %v327 = vmul.f32 %v220, %v326
    %v328 = vsub.f32 1.0, %v327
    %v329 = vmul.f32 %v326, %v328
    %v330 = vadd.f32 %v326, %v329
    %vm331 = vweird.f32 %v220
    %vm332 = vweird.f32 %v326
    %vm333 = vmor %vm331, %vm332
    %v334 = vsel %vm333, %v326, %v330
    %v335 = vand.u32 2147483647, %v220
    %vm336 = vcmp.eq.f32.partialorder %v335, 8.507059e+37
    %v337 = vand.u32 %v220, 2147483648
    %v338 = vor.u32 1.1754944e-38, %v337
    %v339 = vsel %vm336, %v338, %v334
    %v340 = vmul.f32 1.0, %v339
    %v341 = vrcp.pop %v223
    %v342 = vmul.f32 %v223, %v341
    %v343 = vsub.f32 1.0, %v342
    %v344 = vmul.f32 %v341, %v343
    %v345 = vadd.f32 %v341, %v344
    %vm346 = vweird.f32 %v223
    %vm347 = vweird.f32 %v341
    %vm348 = vmor %vm346, %vm347
    %v349 = vsel %vm348, %v341, %v345
    %v350 = vand.u32 2147483647, %v223
    %vm351 = vcmp.eq.f32.partialorder %v350, 8.507059e+37
    %v352 = vand.u32 %v223, 2147483648
    %v353 = vor.u32 1.1754944e-38, %v352
    %v354 = vsel %vm351, %v353, %v349
    %v355 = vmul.f32 1.0, %v354
    %v356 = vrcp.pop %v226
    %v357 = vmul.f32 %v226, %v356
    %v358 = vsub.f32 1.0, %v357
    %v359 = vmul.f32 %v356, %v358
    %v360 = vadd.f32 %v356, %v359
    %vm361 = vweird.f32 %v226
    %vm362 = vweird.f32 %v356
    %vm363 = vmor %vm361, %vm362
    %v364 = vsel %vm363, %v356, %v360
    %v365 = vand.u32 2147483647, %v226
    %vm366 = vcmp.eq.f32.partialorder %v365, 8.507059e+37
    %v367 = vand.u32 %v226, 2147483648
    %v368 = vor.u32 1.1754944e-38, %v367
    %v369 = vsel %vm366, %v368, %v364
    %v370 = vmul.f32 1.0, %v369
    %v371 = vrcp.pop %v229
    %v372 = vmul.f32 %v229, %v371
    %v373 = vsub.f32 1.0, %v372
    %v374 = vmul.f32 %v371, %v373
    %v375 = vadd.f32 %v371, %v374
    %vm376 = vweird.f32 %v229
    %vm377 = vweird.f32 %v371
    %vm378 = vmor %vm376, %vm377
    %v379 = vsel %vm378, %v371, %v375
    %v380 = vand.u32 2147483647, %v229
    %vm381 = vcmp.eq.f32.partialorder %v380, 8.507059e+37
    %v382 = vand.u32 %v229, 2147483648
    %v383 = vor.u32 1.1754944e-38, %v382
    %v384 = vsel %vm381, %v383, %v379
    %v385 = vmul.f32 1.0, %v384
    %v386 = vrcp.pop %v232
    %v387 = vmul.f32 %v232, %v386
    %v388 = vsub.f32 1.0, %v387
    %v389 = vmul.f32 %v386, %v388
    %v390 = vadd.f32 %v386, %v389
    %vm391 = vweird.f32 %v232
    %vm392 = vweird.f32 %v386
    %vm393 = vmor %vm391, %vm392
    %v394 = vsel %vm393, %v386, %v390
    %v395 = vand.u32 2147483647, %v232
    %vm396 = vcmp.eq.f32.partialorder %v395, 8.507059e+37
    %v397 = vand.u32 %v232, 2147483648
    %v398 = vor.u32 1.1754944e-38, %v397
    %v399 = vsel %vm396, %v398, %v394
    %v400 = vmul.f32 1.0, %v399
    %v401 = vrcp.pop %v235
    %v402 = vmul.f32 %v235, %v401
    %v403 = vsub.f32 1.0, %v402
    %v404 = vmul.f32 %v401, %v403
    %v405 = vadd.f32 %v401, %v404
    %vm406 = vweird.f32 %v235
    %vm407 = vweird.f32 %v401
    %vm408 = vmor %vm406, %vm407
    %v409 = vsel %vm408, %v401, %v405
    %v410 = vand.u32 2147483647, %v235
    %vm411 = vcmp.eq.f32.partialorder %v410, 8.507059e+37
    %v412 = vand.u32 %v235, 2147483648
    %v413 = vor.u32 1.1754944e-38, %v412
    %v414 = vsel %vm411, %v413, %v409
    %v415 = vmul.f32 1.0, %v414
    %v416 = vrcp.pop %v238
    %v417 = vmul.f32 %v238, %v416
    %v418 = vsub.f32 1.0, %v417
    %v419 = vmul.f32 %v416, %v418
    %v420 = vadd.f32 %v416, %v419
    %vm421 = vweird.f32 %v238
    %vm422 = vweird.f32 %v416
    %vm423 = vmor %vm421, %vm422
    %v424 = vsel %vm423, %v416, %v420
    %v425 = vand.u32 2147483647, %v238
    %vm426 = vcmp.eq.f32.partialorder %v425, 8.507059e+37
    %v427 = vand.u32 %v238, 2147483648
    %v428 = vor.u32 1.1754944e-38, %v427
    %v429 = vsel %vm426, %v428, %v424
    %v430 = vmul.f32 1.0, %v429
    %v431 = vrcp.pop %v241
    %v432 = vmul.f32 %v241, %v431
    %v433 = vsub.f32 1.0, %v432
    %v434 = vmul.f32 %v431, %v433
    %v435 = vadd.f32 %v431, %v434
    %vm436 = vweird.f32 %v241
    %vm437 = vweird.f32 %v431
    %vm438 = vmor %vm436, %vm437
    %v439 = vsel %vm438, %v431, %v435
    %v440 = vand.u32 2147483647, %v241
    %vm441 = vcmp.eq.f32.partialorder %v440, 8.507059e+37
    %v442 = vand.u32 %v241, 2147483648
    %v443 = vor.u32 1.1754944e-38, %v442
    %v444 = vsel %vm441, %v443, %v439
    %v445 = vmul.f32 1.0, %v444
    %v446 = vrcp.pop %v244
    %v447 = vmul.f32 %v244, %v446
    %v448 = vsub.f32 1.0, %v447
    %v449 = vmul.f32 %v446, %v448
    %v450 = vadd.f32 %v446, %v449
    %vm451 = vweird.f32 %v244
    %vm452 = vweird.f32 %v446
    %vm453 = vmor %vm451, %vm452
    %v454 = vsel %vm453, %v446, %v450
    %v455 = vand.u32 2147483647, %v244
    %vm456 = vcmp.eq.f32.partialorder %v455, 8.507059e+37
    %v457 = vand.u32 %v244, 2147483648
    %v458 = vor.u32 1.1754944e-38, %v457
    %v459 = vsel %vm456, %v458, %v454
    %v460 = vmul.f32 1.0, %v459
    %v461 = vrcp.pop %v247
    %v462 = vmul.f32 %v247, %v461
    %v463 = vsub.f32 1.0, %v462
    %v464 = vmul.f32 %v461, %v463
    %v465 = vadd.f32 %v461, %v464
    %vm466 = vweird.f32 %v247
    %vm467 = vweird.f32 %v461
    %vm468 = vmor %vm466, %vm467
    %v469 = vsel %vm468, %v461, %v465
    %v470 = vand.u32 2147483647, %v247
    %vm471 = vcmp.eq.f32.partialorder %v470, 8.507059e+37
    %v472 = vand.u32 %v247, 2147483648
    %v473 = vor.u32 1.1754944e-38, %v472
    %v474 = vsel %vm471, %v473, %v469
    %v475 = vmul.f32 1.0, %v474
    %v476 = vrcp.pop %v250
    %v477 = vmul.f32 %v250, %v476
    %v478 = vsub.f32 1.0, %v477
    %v479 = vmul.f32 %v476, %v478
    %v480 = vadd.f32 %v476, %v479
    %vm481 = vweird.f32 %v250
    %vm482 = vweird.f32 %v476
    %vm483 = vmor %vm481, %vm482
    %v484 = vsel %vm483, %v476, %v480
    %v485 = vand.u32 2147483647, %v250
    %vm486 = vcmp.eq.f32.partialorder %v485, 8.507059e+37
    %v487 = vand.u32 %v250, 2147483648
    %v488 = vor.u32 1.1754944e-38, %v487
    %v489 = vsel %vm486, %v488, %v484
    %v490 = vmul.f32 1.0, %v489
    %vm491 = vcmp.eq.f32.partialorder %v90, %v109
    %vm492 = vcmp.eq.f32.partialorder %v91, %v112
    %vm493 = vcmp.eq.f32.partialorder %v92, %v115
    %vm494 = vcmp.eq.f32.partialorder %v93, %v118
    %vm495 = vcmp.eq.f32.partialorder %v94, %v121
    %vm496 = vcmp.eq.f32.partialorder %v95, %v124
    %vm497 = vcmp.eq.f32.partialorder %v96, %v127
    %vm498 = vcmp.eq.f32.partialorder %v97, %v130
    %vm499 = vcmp.eq.f32.partialorder %v98, %v133
    %vm500 = vcmp.eq.f32.partialorder %v99, %v136
    %vm501 = vcmp.eq.f32.partialorder %v100, %v139
    %vm502 = vcmp.eq.f32.partialorder %v101, %v142
    %vm503 = vcmp.eq.f32.partialorder %v102, %v145
    %vm504 = vcmp.eq.f32.partialorder %v103, %v148
    %vm505 = vcmp.eq.f32.partialorder %v104, %v151
    %vm506 = vcmp.eq.f32.partialorder %v105, %v154
    %v507 = vsel %vm491, %v46, 32
    %v508 = vsel %vm492, %v46, 32
    %v509 = vsel %vm493, %v46, 32
    %v510 = vsel %vm494, %v46, 32
    %v511 = vsel %vm495, %v46, 32
    %v512 = vsel %vm496, %v46, 32
    %v513 = vsel %vm497, %v46, 32
    %v514 = vsel %vm498, %v46, 32
    %v515 = vsel %vm499, %v46, 32
    %v516 = vsel %vm500, %v46, 32
    %v517 = vsel %vm501, %v46, 32
    %v518 = vsel %vm502, %v46, 32
    %v519 = vsel %vm503, %v46, 32
    %v520 = vsel %vm504, %v46, 32
    %v521 = vsel %vm505, %v46, 32
    %v522 = vsel %vm506, %v46, 32
    %v523 = vsel %vm106, %v507, 2147483647
    %v524 = vand.u32 %v523, 65535
    %v525 = vshra.s32 %v523, 16
    %v526 = vcvt.s32.f32 %v524
    %v527 = vcvt.s32.f32 %v525
    %528 = vmin.xlane.f32.xlu0 %v527
    %v529 = vpop.xlane.xlu0 %528
    %vm530 = vcmp.eq.f32.partialorder %v527, %v529
    %v531 = vsel %vm530, %v526, inf
    %532 = vmin.xlane.f32.xlu0 %v531
    %v533 = vpop.xlane.xlu0 %532
    %v534 = vcvt.f32.s32 %v533
    %v535 = vcvt.f32.s32 %v529
    %v536 = vshll.u32 %v535, 16
    %v537 = vadd.s32 %v536, %v534
    %v538 = vsel %vm106, %v508, 2147483647
    %v539 = vand.u32 %v538, 65535
    %v540 = vshra.s32 %v538, 16
    %v541 = vcvt.s32.f32 %v539
    %v542 = vcvt.s32.f32 %v540
    %543 = vmin.xlane.f32.xlu0 %v542
    %v544 = vpop.xlane.xlu0 %543
    %vm545 = vcmp.eq.f32.partialorder %v542, %v544
    %v546 = vsel %vm545, %v541, inf
    %547 = vmin.xlane.f32.xlu0 %v546
    %v548 = vpop.xlane.xlu0 %547
    %v549 = vcvt.f32.s32 %v548
    %v550 = vcvt.f32.s32 %v544
    %v551 = vshll.u32 %v550, 16
    %v552 = vadd.s32 %v551, %v549
    %v553 = vsel %vm106, %v509, 2147483647
    %v554 = vand.u32 %v553, 65535
    %v555 = vshra.s32 %v553, 16
    %v556 = vcvt.s32.f32 %v554
    %v557 = vcvt.s32.f32 %v555
    %558 = vmin.xlane.f32.xlu0 %v557
    %v559 = vpop.xlane.xlu0 %558
    %vm560 = vcmp.eq.f32.partialorder %v557, %v559
    %v561 = vsel %vm560, %v556, inf
    %562 = vmin.xlane.f32.xlu0 %v561
    %v563 = vpop.xlane.xlu0 %562
    %v564 = vcvt.f32.s32 %v563
    %v565 = vcvt.f32.s32 %v559
    %v566 = vshll.u32 %v565, 16
    %v567 = vadd.s32 %v566, %v564
    %v568 = vsel %vm106, %v510, 2147483647
    %v569 = vand.u32 %v568, 65535
    %v570 = vshra.s32 %v568, 16
    %v571 = vcvt.s32.f32 %v569
    %v572 = vcvt.s32.f32 %v570
    %573 = vmin.xlane.f32.xlu0 %v572
    %v574 = vpop.xlane.xlu0 %573
    %vm575 = vcmp.eq.f32.partialorder %v572, %v574
    %v576 = vsel %vm575, %v571, inf
    %577 = vmin.xlane.f32.xlu0 %v576
    %v578 = vpop.xlane.xlu0 %577
    %v579 = vcvt.f32.s32 %v578
    %v580 = vcvt.f32.s32 %v574
    %v581 = vshll.u32 %v580, 16
    %v582 = vadd.s32 %v581, %v579
    %v583 = vsel %vm106, %v511, 2147483647
    %v584 = vand.u32 %v583, 65535
    %v585 = vshra.s32 %v583, 16
    %v586 = vcvt.s32.f32 %v584
    %v587 = vcvt.s32.f32 %v585
    %588 = vmin.xlane.f32.xlu0 %v587
    %v589 = vpop.xlane.xlu0 %588
    %vm590 = vcmp.eq.f32.partialorder %v587, %v589
    %v591 = vsel %vm590, %v586, inf
    %592 = vmin.xlane.f32.xlu0 %v591
    %v593 = vpop.xlane.xlu0 %592
    %v594 = vcvt.f32.s32 %v593
    %v595 = vcvt.f32.s32 %v589
    %v596 = vshll.u32 %v595, 16
    %v597 = vadd.s32 %v596, %v594
    %v598 = vsel %vm106, %v512, 2147483647
    %v599 = vand.u32 %v598, 65535
    %v600 = vshra.s32 %v598, 16
    %v601 = vcvt.s32.f32 %v599
    %v602 = vcvt.s32.f32 %v600
    %603 = vmin.xlane.f32.xlu0 %v602
    %v604 = vpop.xlane.xlu0 %603
    %vm605 = vcmp.eq.f32.partialorder %v602, %v604
    %v606 = vsel %vm605, %v601, inf
    %607 = vmin.xlane.f32.xlu0 %v606
    %v608 = vpop.xlane.xlu0 %607
    %v609 = vcvt.f32.s32 %v608
    %v610 = vcvt.f32.s32 %v604
    %v611 = vshll.u32 %v610, 16
    %v612 = vadd.s32 %v611, %v609
    %v613 = vsel %vm106, %v513, 2147483647
    %v614 = vand.u32 %v613, 65535
    %v615 = vshra.s32 %v613, 16
    %v616 = vcvt.s32.f32 %v614
    %v617 = vcvt.s32.f32 %v615
    %618 = vmin.xlane.f32.xlu0 %v617
    %v619 = vpop.xlane.xlu0 %618
    %vm620 = vcmp.eq.f32.partialorder %v617, %v619
    %v621 = vsel %vm620, %v616, inf
    %622 = vmin.xlane.f32.xlu0 %v621
    %v623 = vpop.xlane.xlu0 %622
    %v624 = vcvt.f32.s32 %v623
    %v625 = vcvt.f32.s32 %v619
    %v626 = vshll.u32 %v625, 16
    %v627 = vadd.s32 %v626, %v624
    %v628 = vsel %vm106, %v514, 2147483647
    %v629 = vand.u32 %v628, 65535
    %v630 = vshra.s32 %v628, 16
    %v631 = vcvt.s32.f32 %v629
    %v632 = vcvt.s32.f32 %v630
    %633 = vmin.xlane.f32.xlu0 %v632
    %v634 = vpop.xlane.xlu0 %633
    %vm635 = vcmp.eq.f32.partialorder %v632, %v634
    %v636 = vsel %vm635, %v631, inf
    %637 = vmin.xlane.f32.xlu0 %v636
    %v638 = vpop.xlane.xlu0 %637
    %v639 = vcvt.f32.s32 %v638
    %v640 = vcvt.f32.s32 %v634
    %v641 = vshll.u32 %v640, 16
    %v642 = vadd.s32 %v641, %v639
    %v643 = vsel %vm106, %v515, 2147483647
    %v644 = vand.u32 %v643, 65535
    %v645 = vshra.s32 %v643, 16
    %v646 = vcvt.s32.f32 %v644
    %v647 = vcvt.s32.f32 %v645
    %648 = vmin.xlane.f32.xlu0 %v647
    %v649 = vpop.xlane.xlu0 %648
    %vm650 = vcmp.eq.f32.partialorder %v647, %v649
    %v651 = vsel %vm650, %v646, inf
    %652 = vmin.xlane.f32.xlu0 %v651
    %v653 = vpop.xlane.xlu0 %652
    %v654 = vcvt.f32.s32 %v653
    %v655 = vcvt.f32.s32 %v649
    %v656 = vshll.u32 %v655, 16
    %v657 = vadd.s32 %v656, %v654
    %v658 = vsel %vm106, %v516, 2147483647
    %v659 = vand.u32 %v658, 65535
    %v660 = vshra.s32 %v658, 16
    %v661 = vcvt.s32.f32 %v659
    %v662 = vcvt.s32.f32 %v660
    %663 = vmin.xlane.f32.xlu0 %v662
    %v664 = vpop.xlane.xlu0 %663
    %vm665 = vcmp.eq.f32.partialorder %v662, %v664
    %v666 = vsel %vm665, %v661, inf
    %667 = vmin.xlane.f32.xlu0 %v666
    %v668 = vpop.xlane.xlu0 %667
    %v669 = vcvt.f32.s32 %v668
    %v670 = vcvt.f32.s32 %v664
    %v671 = vshll.u32 %v670, 16
    %v672 = vadd.s32 %v671, %v669
    %v673 = vsel %vm106, %v517, 2147483647
    %v674 = vand.u32 %v673, 65535
    %v675 = vshra.s32 %v673, 16
    %v676 = vcvt.s32.f32 %v674
    %v677 = vcvt.s32.f32 %v675
    %678 = vmin.xlane.f32.xlu0 %v677
    %v679 = vpop.xlane.xlu0 %678
    %vm680 = vcmp.eq.f32.partialorder %v677, %v679
    %v681 = vsel %vm680, %v676, inf
    %682 = vmin.xlane.f32.xlu0 %v681
    %v683 = vpop.xlane.xlu0 %682
    %v684 = vcvt.f32.s32 %v683
    %v685 = vcvt.f32.s32 %v679
    %v686 = vshll.u32 %v685, 16
    %v687 = vadd.s32 %v686, %v684
    %v688 = vsel %vm106, %v518, 2147483647
    %v689 = vand.u32 %v688, 65535
    %v690 = vshra.s32 %v688, 16
    %v691 = vcvt.s32.f32 %v689
    %v692 = vcvt.s32.f32 %v690
    %693 = vmin.xlane.f32.xlu0 %v692
    %v694 = vpop.xlane.xlu0 %693
    %vm695 = vcmp.eq.f32.partialorder %v692, %v694
    %v696 = vsel %vm695, %v691, inf
    %697 = vmin.xlane.f32.xlu0 %v696
    %v698 = vpop.xlane.xlu0 %697
    %v699 = vcvt.f32.s32 %v698
    %v700 = vcvt.f32.s32 %v694
    %v701 = vshll.u32 %v700, 16
    %v702 = vadd.s32 %v701, %v699
    %v703 = vsel %vm106, %v519, 2147483647
    %v704 = vand.u32 %v703, 65535
    %v705 = vshra.s32 %v703, 16
    %v706 = vcvt.s32.f32 %v704
    %v707 = vcvt.s32.f32 %v705
    %708 = vmin.xlane.f32.xlu0 %v707
    %v709 = vpop.xlane.xlu0 %708
    %vm710 = vcmp.eq.f32.partialorder %v707, %v709
    %v711 = vsel %vm710, %v706, inf
    %712 = vmin.xlane.f32.xlu0 %v711
    %v713 = vpop.xlane.xlu0 %712
    %v714 = vcvt.f32.s32 %v713
    %v715 = vcvt.f32.s32 %v709
    %v716 = vshll.u32 %v715, 16
    %v717 = vadd.s32 %v716, %v714
    %v718 = vsel %vm106, %v520, 2147483647
    %v719 = vand.u32 %v718, 65535
    %v720 = vshra.s32 %v718, 16
    %v721 = vcvt.s32.f32 %v719
    %v722 = vcvt.s32.f32 %v720
    %723 = vmin.xlane.f32.xlu0 %v722
    %v724 = vpop.xlane.xlu0 %723
    %vm725 = vcmp.eq.f32.partialorder %v722, %v724
    %v726 = vsel %vm725, %v721, inf
    %727 = vmin.xlane.f32.xlu0 %v726
    %v728 = vpop.xlane.xlu0 %727
    %v729 = vcvt.f32.s32 %v728
    %v730 = vcvt.f32.s32 %v724
    %v731 = vshll.u32 %v730, 16
    %v732 = vadd.s32 %v731, %v729
    %v733 = vsel %vm106, %v521, 2147483647
    %v734 = vand.u32 %v733, 65535
    %v735 = vshra.s32 %v733, 16
    %v736 = vcvt.s32.f32 %v734
    %v737 = vcvt.s32.f32 %v735
    %738 = vmin.xlane.f32.xlu0 %v737
    %v739 = vpop.xlane.xlu0 %738
    %vm740 = vcmp.eq.f32.partialorder %v737, %v739
    %v741 = vsel %vm740, %v736, inf
    %742 = vmin.xlane.f32.xlu0 %v741
    %v743 = vpop.xlane.xlu0 %742
    %v744 = vcvt.f32.s32 %v743
    %v745 = vcvt.f32.s32 %v739
    %v746 = vshll.u32 %v745, 16
    %v747 = vadd.s32 %v746, %v744
    %v748 = vsel %vm106, %v522, 2147483647
    %v749 = vand.u32 %v748, 65535
    %v750 = vshra.s32 %v748, 16
    %v751 = vcvt.s32.f32 %v749
    %v752 = vcvt.s32.f32 %v750
    %753 = vmin.xlane.f32.xlu0 %v752
    %v754 = vpop.xlane.xlu0 %753
    %vm755 = vcmp.eq.f32.partialorder %v752, %v754
    %v756 = vsel %vm755, %v751, inf
    %757 = vmin.xlane.f32.xlu0 %v756
    %v758 = vpop.xlane.xlu0 %757
    %v759 = vcvt.f32.s32 %v758
    %v760 = vcvt.f32.s32 %v754
    %v761 = vshll.u32 %v760, 16
    %v762 = vadd.s32 %v761, %v759
    %v763 = vcvt.s32.f32 %v537
    %v764 = vcvt.s32.f32 %v552
    %v765 = vcvt.s32.f32 %v567
    %v766 = vcvt.s32.f32 %v582
    %v767 = vcvt.s32.f32 %v597
    %v768 = vcvt.s32.f32 %v612
    %v769 = vcvt.s32.f32 %v627
    %v770 = vcvt.s32.f32 %v642
    %v771 = vcvt.s32.f32 %v657
    %v772 = vcvt.s32.f32 %v672
    %v773 = vcvt.s32.f32 %v687
    %v774 = vcvt.s32.f32 %v702
    %v775 = vcvt.s32.f32 %v717
    %v776 = vcvt.s32.f32 %v732
    %v777 = vcvt.s32.f32 %v747
    %v778 = vcvt.s32.f32 %v762
    %v779 = vsel %vm47, %v265, 0.0
    %v780 = vsel %vm48, %v280, 0.0
    %v781 = vsel %vm49, %v295, 0.0
    %v782 = vsel %vm50, %v310, 0.0
    %v783 = vsel %vm51, %v325, 0.0
    %v784 = vsel %vm52, %v340, 0.0
    %v785 = vsel %vm53, %v355, 0.0
    %v786 = vsel %vm54, %v370, 0.0
    %v787 = vsel %vm55, %v385, 0.0
    %v788 = vsel %vm56, %v400, 0.0
    %v789 = vsel %vm57, %v415, 0.0
    %v790 = vsel %vm58, %v430, 0.0
    %v791 = vsel %vm59, %v445, 0.0
    %v792 = vsel %vm60, %v460, 0.0
    %v793 = vsel %vm61, %v475, 0.0
    %v794 = vsel %vm62, %v490, 0.0
    %v795 = vadd.f32 %v779, %v780
    %v796 = vadd.f32 %v795, %v781
    %v797 = vadd.f32 %v796, %v782
    %v798 = vadd.f32 %v797, %v783
    %v799 = vadd.f32 %v798, %v784
    %v800 = vadd.f32 %v799, %v785
    %v801 = vadd.f32 %v800, %v786
    %v802 = vadd.f32 %v801, %v787
    %v803 = vadd.f32 %v802, %v788
    %v804 = vadd.f32 %v803, %v789
    %v805 = vadd.f32 %v804, %v790
    %v806 = vadd.f32 %v805, %v791
    %v807 = vadd.f32 %v806, %v792
    %v808 = vadd.f32 %v807, %v793
    %v809 = vadd.f32 %v808, %v794
    %v810 = vrot.slane %v809, 4
    %v811 = vadd.f32 %v809, %v810
    %v812 = vrot.slane %v811, 2
    %v813 = vadd.f32 %v811, %v812
    %v814 = vrot.slane %v813, 1
    %v815 = vadd.f32 %v813, %v814
    %v816 = vsel %vm47, %v763, 0.0
    %v817 = vsel %vm48, %v764, 0.0
    %v818 = vsel %vm49, %v765, 0.0
    %v819 = vsel %vm50, %v766, 0.0
    %v820 = vsel %vm51, %v767, 0.0
    %v821 = vsel %vm52, %v768, 0.0
    %v822 = vsel %vm53, %v769, 0.0
    %v823 = vsel %vm54, %v770, 0.0
    %v824 = vsel %vm55, %v771, 0.0
    %v825 = vsel %vm56, %v772, 0.0
    %v826 = vsel %vm57, %v773, 0.0
    %v827 = vsel %vm58, %v774, 0.0
    %v828 = vsel %vm59, %v775, 0.0
    %v829 = vsel %vm60, %v776, 0.0
    %v830 = vsel %vm61, %v777, 0.0
    %v831 = vsel %vm62, %v778, 0.0
    %v832 = vadd.f32 %v816, %v817
    %v833 = vadd.f32 %v832, %v818
    %v834 = vadd.f32 %v833, %v819
    %v835 = vadd.f32 %v834, %v820
    %v836 = vadd.f32 %v835, %v821
    %v837 = vadd.f32 %v836, %v822
    %v838 = vadd.f32 %v837, %v823
    %v839 = vadd.f32 %v838, %v824
    %v840 = vadd.f32 %v839, %v825
    %v841 = vadd.f32 %v840, %v826
    %v842 = vadd.f32 %v841, %v827
    %v843 = vadd.f32 %v842, %v828
    %v844 = vadd.f32 %v843, %v829
    %v845 = vadd.f32 %v844, %v830
    %v846 = vadd.f32 %v845, %v831
    %v847 = vrot.slane %v846, 4
    %v848 = vadd.f32 %v846, %v847
    %v849 = vrot.slane %v848, 2
    %v850 = vadd.f32 %v848, %v849
    %v851 = vrot.slane %v850, 1
    %v852 = vadd.f32 %v850, %v851
    %v853 = vstv %s63
    %v854 = vsub.f32 %v815, %v853
    %v855 = vstv %s80
    %v856 = vmul.f32 %v854, %v855
    %v857 = vstv %s72
    %v858 = vadd.f32 %v857, %v856
    %v859 = vstv %s64
    %vm860 = vcmp.ge.f32.partialorder %v815, %v859
    %v861 = vsub.f32 %v815, %v859
    %v862 = vstv %s81
    %v863 = vmul.f32 %v861, %v862
    %v864 = vstv %s73
    %v865 = vadd.f32 %v864, %v863
    %v866 = vsel %vm860, %v865, %v858
    %v867 = vstv %s65
    %vm868 = vcmp.ge.f32.partialorder %v815, %v867
    %v869 = vsub.f32 %v815, %v867
    %v870 = vstv %s82
    %v871 = vmul.f32 %v869, %v870
    %v872 = vstv %s74
    %v873 = vadd.f32 %v872, %v871
    %v874 = vsel %vm868, %v873, %v866
    %v875 = vstv %s66
    %vm876 = vcmp.ge.f32.partialorder %v815, %v875
    %v877 = vsub.f32 %v815, %v875
    %v878 = vstv %s83
    %v879 = vmul.f32 %v877, %v878
    %v880 = vstv %s75
    %v881 = vadd.f32 %v880, %v879
    %v882 = vsel %vm876, %v881, %v874
    %v883 = vstv %s67
    %vm884 = vcmp.ge.f32.partialorder %v815, %v883
    %v885 = vsub.f32 %v815, %v883
    %v886 = vstv %s84
    %v887 = vmul.f32 %v885, %v886
    %v888 = vstv %s76
    %v889 = vadd.f32 %v888, %v887
    %v890 = vsel %vm884, %v889, %v882
    %v891 = vstv %s68
    %vm892 = vcmp.ge.f32.partialorder %v815, %v891
    %v893 = vsub.f32 %v815, %v891
    %v894 = vstv %s85
    %v895 = vmul.f32 %v893, %v894
    %v896 = vstv %s77
    %v897 = vadd.f32 %v896, %v895
    %v898 = vsel %vm892, %v897, %v890
    %v899 = vstv %s69
    %vm900 = vcmp.ge.f32.partialorder %v815, %v899
    %v901 = vsub.f32 %v815, %v899
    %v902 = vstv %s86
    %v903 = vmul.f32 %v901, %v902
    %v904 = vstv %s78
    %v905 = vadd.f32 %v904, %v903
    %v906 = vsel %vm900, %v905, %v898
    %v907 = vstv %s70
    %vm908 = vcmp.ge.f32.partialorder %v815, %v907
    %v909 = vsub.f32 %v815, %v907
    %v910 = vstv %s87
    %v911 = vmul.f32 %v909, %v910
    %v912 = vstv %s79
    %v913 = vadd.f32 %v912, %v911
    %v914 = vsel %vm908, %v913, %v906
    %vm915 = vcmp.lt.f32.partialorder %v815, %v853
    %v916 = vstv %s88
    %v917 = vsel %vm915, %v916, %v914
    %v918 = vstv %s71
    %vm919 = vcmp.gt.f32.partialorder %v815, %v918
    %v920 = vstv %s89
    %v921 = vsel %vm919, %v920, %v917
    %922 = vst [vmem:[#allocation5] sm:$0x1] %v921
    %v923 = vcvt.f32.s32.to.zero.pseudo %v852
    %924 = vst [vmem:[#allocation6] sm:$0x1] %v923
    // Predicated region
    $region14: #{tpu_custom_call.1} parent=1 // pred_check
      _
    $region15: #{tpu_custom_call.1} parent=1 // pred_check_branch
      %926 = sbr.rel (0) target = $region17
    $region16: #{tpu_custom_call.1} parent=1 // pred_region
      %928 = vsyncadd [#allocation3], 0
      %s930 = sshll.u32 [#allocation5], 4
      %s931 = int_to_ptr.vmem [resolvable:$true] %s930
      %s932 = sshll.u32 %s2, 4
      %s933 = int_to_ptr.hbm [resolvable:$true] %s932
      %935 = dma.vmem_to_hbm [thread:$0]  %s931, 16, %s933, [#allocation3]
    $region17: #{tpu_custom_call.1} parent=1 // pred_fallthru
      _
    // Predicated region
    $region18: #{tpu_custom_call.1} parent=1 // pred_check
      _
    $region19: #{tpu_custom_call.1} parent=1 // pred_check_branch
      %937 = sbr.rel (0) target = $region21
    $region20: #{tpu_custom_call.1} parent=1 // pred_region
      %939 = vsyncadd [#allocation7], 0
      %s941 = sshll.u32 [#allocation6], 4
      %s942 = int_to_ptr.vmem [resolvable:$true] %s941
      %s943 = sshll.u32 %s3, 4
      %s944 = int_to_ptr.hbm [resolvable:$true] %s943
      %946 = dma.vmem_to_hbm [thread:$0]  %s942, 16, %s944, [#allocation7]
    $region21: #{tpu_custom_call.1} parent=1 // pred_fallthru
      _
    // Predicated region
    $region22: #{tpu_custom_call.1} parent=1 // pred_check
      _
    $region23: #{tpu_custom_call.1} parent=1 // pred_check_branch
      %948 = sbr.rel (0) target = $region25
    $region24: #{tpu_custom_call.1} parent=1 // pred_region
      %950 = dma.done [#allocation3], 16
    $region25: #{tpu_custom_call.1} parent=1 // pred_fallthru
      _
    // Predicated region
    $region26: #{tpu_custom_call.1} parent=1 // pred_check
      _
    $region27: #{tpu_custom_call.1} parent=1 // pred_check_branch
      %952 = sbr.rel (0) target = $region29
    $region28: #{tpu_custom_call.1} parent=1 // pred_region
      %954 = dma.done [#allocation7], 16
    $region29: #{tpu_custom_call.1} parent=1 // pred_fallthru
      _
    %955 = vsyncpa [#allocation3], 1
    %956 = vsyncpa [#allocation7], 1
    %957 = vsyncpa [#allocation4], 1

</llo_original>
